<compile_context>
chip_gen: v7x
topology: tpu7x:2x2x1
jax: 0.10.0
libtpu: 0.0.40
codegen_flags: <defaults>
</compile_context>

<pallas_src>
import functools

import jax
import jax.numpy as jnp
from jax import lax
from jax.experimental import pallas as pl
from jax.experimental.pallas import tpu as pltpu


_INV_SQRT2 = 0.7071067811865476


def _gelu_tanh(x):
    """tanh-approx GELU; transcendental routed to the EUP."""
    c0 = jnp.asarray(0.7978845608028654, x.dtype)   # sqrt(2/pi)
    c1 = jnp.asarray(0.044715, x.dtype)
    half = jnp.asarray(0.5, x.dtype)
    one = jnp.asarray(1.0, x.dtype)
    return half * x * (one + jnp.tanh(c0 * (x + c1 * (x * x * x))))


def _gelu_exact(x):
    # PyTorch nn.GELU() default (exact erf) - used only by the pure-JAX reference.
    return 0.5 * x * (1.0 + lax.erf(x * _INV_SQRT2))


def _mlp_kernel(xcat_ref, w1_ref, wmid_ref, b14_ref, w5_ref, b5_ref, o_ref,
                *, compute_dtype):
    # --- layer 1: (TB, C+2) @ (C+2, Hp), f32 accumulate on the MXU -----------
    h = jnp.dot(xcat_ref[...], w1_ref[...], preferred_element_type=jnp.float32)
    h = _gelu_tanh(h.astype(compute_dtype) + b14_ref[0:1, :])

    # --- layers 2-4: bf16 MXU matmuls; elementwise stays in compute_dtype ----
    for layer in range(3):                      # static unroll
        h = jnp.dot(h.astype(jnp.bfloat16), wmid_ref[layer],
                    preferred_element_type=compute_dtype)
        h = _gelu_tanh(h + b14_ref[layer + 1:layer + 2, :])

    # --- layer 5 (H -> 1): lane-dense (1, TB) row via a transposed-RHS dot ---
    out = lax.dot_general(w5_ref[...], h, (((1,), (1,)), ((), ())),
                          preferred_element_type=jnp.float32)
    out = out + b5_ref[...]
    o_ref[0] = out.astype(o_ref.dtype)          # o_ref block is (1, 1, TB)


def _round_up(x, m):
    return ((x + m - 1) // m) * m


def _elementwise_dtype():
    """bf16 elementwise on v6e/v7x (bf16 VALU/EUP); f32 on v5e and older."""
    try:
        kind = jax.devices()[0].device_kind.lower()
    except Exception:
        return jnp.float32
    if "v6" in kind or "v7" in kind:
        return jnp.bfloat16
    return jnp.float32


def init_mlp_params(key, cov_dimension, hidden_dim=128):
    """PyTorch nn.Linear-style init: U(-1/sqrt(fan_in), 1/sqrt(fan_in))."""
    initial_dim = cov_dimension + 1 + 1
    dims = [(initial_dim, hidden_dim),
            (hidden_dim, hidden_dim),
            (hidden_dim, hidden_dim),
            (hidden_dim, hidden_dim),
            (hidden_dim, 1)]
    params = []
    for (fan_in, fan_out) in dims:
        key, kw, kb = jax.random.split(key, 3)
        bound = 1.0 / (fan_in ** 0.5)
        # Stored as (fan_in, fan_out) so the kernel computes x @ W + b.
        w = jax.random.uniform(kw, (fan_in, fan_out), jnp.float32, -bound, bound)
        b = jax.random.uniform(kb, (1, fan_out), jnp.float32, -bound, bound)
        params.append((w, b))
    return params


def mlp_forward(x, cond, t, params, *, tile_b=2048):
    """Pallas forward: equivalent to MLP.forward(x, cond, t) in the PyTorch spec."""
    x = x.astype(jnp.float32)
    cond = cond.astype(jnp.float32)
    t = t.astype(jnp.float32)
    B = x.shape[0]
    C = cond.shape[1]
    Cin = C + 2

    (w1, b1), (w2, b2), (w3, b3), (w4, b4), (w5, b5) = params
    H = w1.shape[1]
    Hp = _round_up(max(H, 128), 128)            # pad hidden width to full 128 lanes
    padH = Hp - H
    cdt = _elementwise_dtype()

    # --- one-time operand staging / packing (wrapper side) -------------------
    w1f = jnp.pad(w1.astype(jnp.float32), ((0, 0), (0, padH)))            # (Cin, Hp)
    wmid = jnp.pad(jnp.stack([w2, w3, w4], axis=0),
                   ((0, 0), (0, padH), (0, padH))).astype(jnp.bfloat16)   # (3, Hp, Hp)
    b14 = jnp.pad(jnp.concatenate([b1, b2, b3, b4], axis=0),
                  ((0, 0), (0, padH))).astype(cdt)                        # (4, Hp)
    w5r = jnp.pad(w5.astype(jnp.float32).T, ((0, 0), (0, padH))).astype(cdt)  # (1, Hp)
    b5f = b5.astype(jnp.float32).reshape(1, 1)                            # (1, 1)

    # --- batch tiling ---------------------------------------------------------
    TB = min(tile_b, B)
    if 512 <= B <= tile_b:
        # ensure >= 2 grid steps so the "parallel" axis spans both TCs on v7x
        TB = min(TB, _round_up((B + 1) // 2, 256))
    if TB < B:
        TB = max(8, (TB // 8) * 8)
    G = pl.cdiv(B, TB)
    Bp = G * TB

    xcat = jnp.concatenate([t, x, cond], axis=1)       # fused torch.cat, (B, Cin)
    if Bp != B:
        xcat = jnp.pad(xcat, ((0, Bp - B), (0, 0)))    # defined values in the tail tile

    kernel = functools.partial(_mlp_kernel, compute_dtype=cdt)
    out = pl.pallas_call(
        kernel,
        out_shape=jax.ShapeDtypeStruct((G, 1, TB), jnp.float32),
        grid=(G,),
        in_specs=[
            pl.BlockSpec((TB, Cin), lambda i: (i, 0)),        # activations (batch-tiled)
            pl.BlockSpec((Cin, Hp), lambda i: (0, 0)),        # W1      (VMEM-resident)
            pl.BlockSpec((3, Hp, Hp), lambda i: (0, 0, 0)),   # W2..W4 packed (bf16)
            pl.BlockSpec((4, Hp), lambda i: (0, 0)),          # b1..b4 packed
            pl.BlockSpec((1, Hp), lambda i: (0, 0)),          # W5 as a row
            pl.BlockSpec((1, 1), lambda i: (0, 0)),           # b5
        ],
        out_specs=pl.BlockSpec((1, 1, TB), lambda i: (i, 0, 0)),   # lane-dense rows
        compiler_params=pltpu.CompilerParams(
            dimension_semantics=("parallel",),                # shard batch over TCs (v7x)
            vmem_limit_bytes=48 * 1024 * 1024,                # < v7x 64 MiB physical
        ),
    )(xcat, w1f, wmid, b14, w5r, b5f)

    return out.reshape(-1)[:B].reshape(B, 1)


def mlp_reference(x, cond, t, params):
    """Pure-JAX f32 / exact-GELU reference of MLP.forward (PyTorch semantics)."""
    h = jnp.concatenate([t, x, cond], axis=1).astype(jnp.float32)
    for i, (w, b) in enumerate(params):
        h = h @ w + b
        if i < len(params) - 1:
            h = _gelu_exact(h)
    return h


# --------------------------- DDPM glue (plain JAX) ---------------------------

def ddpm_schedules(beta1, beta2, T):
    assert beta1 < beta2 < 1.0
    tt = jnp.arange(0, T + 1, dtype=jnp.float32)
    beta_t = (beta2 - beta1) * tt / T + beta1
    alpha_t = 1.0 - beta_t
    alphabar_t = jnp.exp(jnp.cumsum(jnp.log(alpha_t)))
    return {
        "alpha_t": alpha_t,
        "oneover_sqrta": 1.0 / jnp.sqrt(alpha_t),
        "sqrt_beta_t": jnp.sqrt(beta_t),
        "alphabar_t": alphabar_t,
        "sqrtab": jnp.sqrt(alphabar_t),
        "sqrtmab": jnp.sqrt(1.0 - alphabar_t),
        "mab_over_sqrtmab": (1.0 - alpha_t) / jnp.sqrt(1.0 - alphabar_t),
    }


def ddpm_loss(key, x, cond, params, sched, n_T, forward_fn):
    """DDPM.forward (training loss); randomness / MSE stay in plain JAX."""
    k_t, k_n = jax.random.split(key)
    B = x.shape[0]
    ts = jax.random.randint(k_t, (B, 1), 1, n_T + 1)
    noise = jax.random.normal(k_n, x.shape, jnp.float32)
    x_t = sched["sqrtab"][ts] * x + sched["sqrtmab"][ts] * noise
    pred = forward_fn(x_t, cond, ts.astype(jnp.float32) / n_T, params)
    return jnp.mean((noise - pred) ** 2)

# TODO(synk): DDPM.sample's sequential n_T-step reverse loop and the training/fit
# loop are host-side control flow; they reuse mlp_forward and are not kernelized.


if __name__ == "__main__":
    cov_dimension = 4
    hidden_dim = 32
    batch = 8
    n_T = 50

    key = jax.random.PRNGKey(0)
    key, kx, kc, kp, kl = jax.random.split(key, 5)
    x = jax.random.normal(kx, (batch, 1), jnp.float32)
    cond = jax.random.normal(kc, (batch, cov_dimension), jnp.float32)
    t_lin = jnp.full((batch, 1), 0.5, jnp.float32)

    params = init_mlp_params(kp, cov_dimension, hidden_dim)

    # Eps-model forward: Pallas kernel vs f32/erf reference
    # (bf16 mid-layers + tanh GELU => loose tolerance).
    out = jax.block_until_ready(mlp_forward(x, cond, t_lin, params))
    ref = mlp_reference(x, cond, t_lin, params)
    assert out.shape == (batch, 1), out.shape
    assert bool(jnp.all(jnp.isfinite(out)))
    assert jnp.allclose(out, ref, atol=6e-2, rtol=6e-2), \
        f"max abs err = {jnp.max(jnp.abs(out - ref))}"

    # DDPM training-style forward (loss) through the kernel.
    sched = ddpm_schedules(1e-4, 0.02, n_T)
    loss_k = jax.block_until_ready(ddpm_loss(kl, x, cond, params, sched, n_T, mlp_forward))
    loss_r = ddpm_loss(kl, x, cond, params, sched, n_T, mlp_reference)
    assert bool(jnp.isfinite(loss_k))
    assert jnp.allclose(loss_k, loss_r, atol=1e-1, rtol=1e-1), (loss_k, loss_r)

    print("KERNEL_OK")
</pallas_src>

<mosaic_0001>
module attributes {stable_mosaic.version = 11 : i64} {
  func.func @_mlp_kernel(%arg0: i32, %arg1: memref<8x6xf32, #tpu.memory_space<vmem>>, %arg2: memref<6x128xf32, #tpu.memory_space<vmem>>, %arg3: memref<3x128x128xbf16, #tpu.memory_space<vmem>>, %arg4: memref<4x128xf32, #tpu.memory_space<vmem>>, %arg5: memref<1x128xf32, #tpu.memory_space<vmem>>, %arg6: memref<1x1xf32, #tpu.memory_space<vmem>>, %arg7: memref<1x1x8xf32, #tpu.memory_space<vmem>>) attributes {dimension_semantics = [#tpu.dimension_semantics<parallel>], iteration_bounds = array<i64: 1>, scalar_prefetch = 0 : i64, scratch_operands = 0 : i64, tpu.core_type = #tpu.core_type<tc>, window_params = [{transform_indices = @transform_0, window_bounds = array<i64: 8, 6>}, {pipeline_mode = #tpu.pipeline_mode<synchronous>, transform_indices = @transform_1, window_bounds = array<i64: 6, 128>}, {pipeline_mode = #tpu.pipeline_mode<synchronous>, transform_indices = @transform_2, window_bounds = array<i64: 3, 128, 128>}, {pipeline_mode = #tpu.pipeline_mode<synchronous>, transform_indices = @transform_3, window_bounds = array<i64: 4, 128>}, {pipeline_mode = #tpu.pipeline_mode<synchronous>, transform_indices = @transform_4, window_bounds = array<i64: 1, 128>}, {pipeline_mode = #tpu.pipeline_mode<synchronous>, transform_indices = @transform_5, window_bounds = array<i64: 1, 1>}, {transform_indices = @transform_6, window_bounds = array<i64: 1, 1, 8>}]} {
    %c0 = arith.constant 0 : index
    %c0_0 = arith.constant 0 : index
    %0 = vector.load %arg1[%c0, %c0_0] : memref<8x6xf32, #tpu.memory_space<vmem>>, vector<8x6xf32>
    %c0_1 = arith.constant 0 : index
    %c0_2 = arith.constant 0 : index
    %1 = vector.load %arg2[%c0_1, %c0_2] : memref<6x128xf32, #tpu.memory_space<vmem>>, vector<6x128xf32>
    %cst = arith.constant dense<0.000000e+00> : vector<8x128xf32>
    %2 = tpu.matmul %0, %1, %cst {dimension_numbers = #tpu.dot_dimension_numbers<[1], [0], [0], [1], [0, 0, 1, 1], [], []>} : vector<8x6xf32>, vector<6x128xf32>, vector<8x128xf32> -> vector<8x128xf32>
    %c0_3 = arith.constant 0 : index
    %c0_4 = arith.constant 0 : index
    %3 = vector.load %arg4[%c0_3, %c0_4] : memref<4x128xf32, #tpu.memory_space<vmem>>, vector<1x128xf32>
    %4 = vector.broadcast %3 : vector<1x128xf32> to vector<8x128xf32>
    %5 = arith.addf %2, %4 : vector<8x128xf32>
    %cst_5 = arith.constant 5.000000e-01 : f32
    %6 = vector.broadcast %cst_5 : f32 to vector<8x128xf32>
    %7 = arith.mulf %6, %5 : vector<8x128xf32>
    %8 = arith.mulf %5, %5 : vector<8x128xf32>
    %9 = arith.mulf %8, %5 : vector<8x128xf32>
    %cst_6 = arith.constant 4.471500e-02 : f32
    %10 = vector.broadcast %cst_6 : f32 to vector<8x128xf32>
    %11 = arith.mulf %10, %9 : vector<8x128xf32>
    %12 = arith.addf %5, %11 : vector<8x128xf32>
    %cst_7 = arith.constant 0.797884583 : f32
    %13 = vector.broadcast %cst_7 : f32 to vector<8x128xf32>
    %14 = arith.mulf %13, %12 : vector<8x128xf32>
    %15 = math.tanh %14 : vector<8x128xf32>
    %cst_8 = arith.constant 1.000000e+00 : f32
    %16 = vector.broadcast %cst_8 : f32 to vector<8x128xf32>
    %17 = arith.addf %16, %15 : vector<8x128xf32>
    %18 = arith.mulf %7, %17 : vector<8x128xf32>
    %19 = arith.truncf %18 : vector<8x128xf32> to vector<8x128xbf16>
    %c0_9 = arith.constant 0 : index
    %c0_10 = arith.constant 0 : index
    %c0_11 = arith.constant 0 : index
    %20 = vector.load %arg3[%c0_9, %c0_10, %c0_11] : memref<3x128x128xbf16, #tpu.memory_space<vmem>>, vector<1x128x128xbf16>
    %21 = vector.shape_cast %20 : vector<1x128x128xbf16> to vector<128x128xbf16>
    %cst_12 = arith.constant dense<0.000000e+00> : vector<8x128xf32>
    %22 = tpu.matmul %19, %21, %cst_12 {dimension_numbers = #tpu.dot_dimension_numbers<[1], [0], [0], [1], [0, 0, 1, 1], [], []>} : vector<8x128xbf16>, vector<128x128xbf16>, vector<8x128xf32> -> vector<8x128xf32>
    %c1 = arith.constant 1 : index
    %c0_13 = arith.constant 0 : index
    %23 = vector.load %arg4[%c1, %c0_13] : memref<4x128xf32, #tpu.memory_space<vmem>>, vector<1x128xf32>
    %24 = vector.broadcast %23 : vector<1x128xf32> to vector<8x128xf32>
    %25 = arith.addf %22, %24 : vector<8x128xf32>
    %cst_14 = arith.constant 5.000000e-01 : f32
    %26 = vector.broadcast %cst_14 : f32 to vector<8x128xf32>
    %27 = arith.mulf %26, %25 : vector<8x128xf32>
    %28 = arith.mulf %25, %25 : vector<8x128xf32>
    %29 = arith.mulf %28, %25 : vector<8x128xf32>
    %cst_15 = arith.constant 4.471500e-02 : f32
    %30 = vector.broadcast %cst_15 : f32 to vector<8x128xf32>
    %31 = arith.mulf %30, %29 : vector<8x128xf32>
    %32 = arith.addf %25, %31 : vector<8x128xf32>
    %cst_16 = arith.constant 0.797884583 : f32
    %33 = vector.broadcast %cst_16 : f32 to vector<8x128xf32>
    %34 = arith.mulf %33, %32 : vector<8x128xf32>
    %35 = math.tanh %34 : vector<8x128xf32>
    %cst_17 = arith.constant 1.000000e+00 : f32
    %36 = vector.broadcast %cst_17 : f32 to vector<8x128xf32>
    %37 = arith.addf %36, %35 : vector<8x128xf32>
    %38 = arith.mulf %27, %37 : vector<8x128xf32>
    %39 = arith.truncf %38 : vector<8x128xf32> to vector<8x128xbf16>
    %c1_18 = arith.constant 1 : index
    %c0_19 = arith.constant 0 : index
    %c0_20 = arith.constant 0 : index
    %40 = vector.load %arg3[%c1_18, %c0_19, %c0_20] : memref<3x128x128xbf16, #tpu.memory_space<vmem>>, vector<1x128x128xbf16>
    %41 = vector.shape_cast %40 : vector<1x128x128xbf16> to vector<128x128xbf16>
    %cst_21 = arith.constant dense<0.000000e+00> : vector<8x128xf32>
    %42 = tpu.matmul %39, %41, %cst_21 {dimension_numbers = #tpu.dot_dimension_numbers<[1], [0], [0], [1], [0, 0, 1, 1], [], []>} : vector<8x128xbf16>, vector<128x128xbf16>, vector<8x128xf32> -> vector<8x128xf32>
    %c2 = arith.constant 2 : index
    %c0_22 = arith.constant 0 : index
    %43 = vector.load %arg4[%c2, %c0_22] : memref<4x128xf32, #tpu.memory_space<vmem>>, vector<1x128xf32>
    %44 = vector.broadcast %43 : vector<1x128xf32> to vector<8x128xf32>
    %45 = arith.addf %42, %44 : vector<8x128xf32>
    %cst_23 = arith.constant 5.000000e-01 : f32
    %46 = vector.broadcast %cst_23 : f32 to vector<8x128xf32>
    %47 = arith.mulf %46, %45 : vector<8x128xf32>
    %48 = arith.mulf %45, %45 : vector<8x128xf32>
    %49 = arith.mulf %48, %45 : vector<8x128xf32>
    %cst_24 = arith.constant 4.471500e-02 : f32
    %50 = vector.broadcast %cst_24 : f32 to vector<8x128xf32>
    %51 = arith.mulf %50, %49 : vector<8x128xf32>
    %52 = arith.addf %45, %51 : vector<8x128xf32>
    %cst_25 = arith.constant 0.797884583 : f32
    %53 = vector.broadcast %cst_25 : f32 to vector<8x128xf32>
    %54 = arith.mulf %53, %52 : vector<8x128xf32>
    %55 = math.tanh %54 : vector<8x128xf32>
    %cst_26 = arith.constant 1.000000e+00 : f32
    %56 = vector.broadcast %cst_26 : f32 to vector<8x128xf32>
    %57 = arith.addf %56, %55 : vector<8x128xf32>
    %58 = arith.mulf %47, %57 : vector<8x128xf32>
    %59 = arith.truncf %58 : vector<8x128xf32> to vector<8x128xbf16>
    %c2_27 = arith.constant 2 : index
    %c0_28 = arith.constant 0 : index
    %c0_29 = arith.constant 0 : index
    %60 = vector.load %arg3[%c2_27, %c0_28, %c0_29] : memref<3x128x128xbf16, #tpu.memory_space<vmem>>, vector<1x128x128xbf16>
    %61 = vector.shape_cast %60 : vector<1x128x128xbf16> to vector<128x128xbf16>
    %cst_30 = arith.constant dense<0.000000e+00> : vector<8x128xf32>
    %62 = tpu.matmul %59, %61, %cst_30 {dimension_numbers = #tpu.dot_dimension_numbers<[1], [0], [0], [1], [0, 0, 1, 1], [], []>} : vector<8x128xbf16>, vector<128x128xbf16>, vector<8x128xf32> -> vector<8x128xf32>
    %c3 = arith.constant 3 : index
    %c0_31 = arith.constant 0 : index
    %63 = vector.load %arg4[%c3, %c0_31] : memref<4x128xf32, #tpu.memory_space<vmem>>, vector<1x128xf32>
    %64 = vector.broadcast %63 : vector<1x128xf32> to vector<8x128xf32>
    %65 = arith.addf %62, %64 : vector<8x128xf32>
    %cst_32 = arith.constant 5.000000e-01 : f32
    %66 = vector.broadcast %cst_32 : f32 to vector<8x128xf32>
    %67 = arith.mulf %66, %65 : vector<8x128xf32>
    %68 = arith.mulf %65, %65 : vector<8x128xf32>
    %69 = arith.mulf %68, %65 : vector<8x128xf32>
    %cst_33 = arith.constant 4.471500e-02 : f32
    %70 = vector.broadcast %cst_33 : f32 to vector<8x128xf32>
    %71 = arith.mulf %70, %69 : vector<8x128xf32>
    %72 = arith.addf %65, %71 : vector<8x128xf32>
    %cst_34 = arith.constant 0.797884583 : f32
    %73 = vector.broadcast %cst_34 : f32 to vector<8x128xf32>
    %74 = arith.mulf %73, %72 : vector<8x128xf32>
    %75 = math.tanh %74 : vector<8x128xf32>
    %cst_35 = arith.constant 1.000000e+00 : f32
    %76 = vector.broadcast %cst_35 : f32 to vector<8x128xf32>
    %77 = arith.addf %76, %75 : vector<8x128xf32>
    %78 = arith.mulf %67, %77 : vector<8x128xf32>
    %c0_36 = arith.constant 0 : index
    %c0_37 = arith.constant 0 : index
    %79 = vector.load %arg5[%c0_36, %c0_37] : memref<1x128xf32, #tpu.memory_space<vmem>>, vector<1x128xf32>
    %cst_38 = arith.constant dense<0.000000e+00> : vector<1x8xf32>
    %80 = tpu.matmul %79, %78, %cst_38 {dimension_numbers = #tpu.dot_dimension_numbers<[1], [1], [0], [0], [0, 0, 1, 0], [], []>} : vector<1x128xf32>, vector<8x128xf32>, vector<1x8xf32> -> vector<1x8xf32>
    %c0_39 = arith.constant 0 : index
    %c0_40 = arith.constant 0 : index
    %81 = vector.load %arg6[%c0_39, %c0_40] : memref<1x1xf32, #tpu.memory_space<vmem>>, vector<1x1xf32>
    %82 = vector.broadcast %81 : vector<1x1xf32> to vector<1x8xf32>
    %83 = arith.addf %80, %82 : vector<1x8xf32>
    %c0_41 = arith.constant 0 : index
    %c0_42 = arith.constant 0 : index
    %c0_43 = arith.constant 0 : index
    %84 = vector.load %arg7[%c0_41, %c0_42, %c0_43] : memref<1x1x8xf32, #tpu.memory_space<vmem>>, vector<1x1x8xf32>
    %85 = vector.shape_cast %84 : vector<1x1x8xf32> to vector<1x8xf32>
    %86 = vector.shape_cast %83 : vector<1x8xf32> to vector<1x1x8xf32>
    tpu.vector_store %arg7[%c0_41, %c0_42, %c0_43], %86 {strides = array<i32>} : memref<1x1x8xf32, #tpu.memory_space<vmem>>, vector<1x1x8xf32>,
    return
  }
  func.func @transform_0(%arg0: i32) -> (i32, i32) {
    %c0_i32 = arith.constant 0 : i32
    %c0_i32_0 = arith.constant 0 : i32
    return %arg0, %c0_i32 : i32, i32
  }
  func.func @transform_1(%arg0: i32) -> (i32, i32) {
    %c0_i32 = arith.constant 0 : i32
    %c0_i32_0 = arith.constant 0 : i32
    %c0_i32_1 = arith.constant 0 : i32
    return %c0_i32, %c0_i32_0 : i32, i32
  }
  func.func @transform_2(%arg0: i32) -> (i32, i32, i32) {
    %c0_i32 = arith.constant 0 : i32
    %c0_i32_0 = arith.constant 0 : i32
    %c0_i32_1 = arith.constant 0 : i32
    %c0_i32_2 = arith.constant 0 : i32
    return %c0_i32, %c0_i32_0, %c0_i32_1 : i32, i32, i32
  }
  func.func @transform_3(%arg0: i32) -> (i32, i32) {
    %c0_i32 = arith.constant 0 : i32
    %c0_i32_0 = arith.constant 0 : i32
    %c0_i32_1 = arith.constant 0 : i32
    return %c0_i32, %c0_i32_0 : i32, i32
  }
  func.func @transform_4(%arg0: i32) -> (i32, i32) {
    %c0_i32 = arith.constant 0 : i32
    %c0_i32_0 = arith.constant 0 : i32
    %c0_i32_1 = arith.constant 0 : i32
    return %c0_i32, %c0_i32_0 : i32, i32
  }
  func.func @transform_5(%arg0: i32) -> (i32, i32) {
    %c0_i32 = arith.constant 0 : i32
    %c0_i32_0 = arith.constant 0 : i32
    %c0_i32_1 = arith.constant 0 : i32
    return %c0_i32, %c0_i32_0 : i32, i32
  }
  func.func @transform_6(%arg0: i32) -> (i32, i32, i32) {
    %c0_i32 = arith.constant 0 : i32
    %c0_i32_0 = arith.constant 0 : i32
    %c0_i32_1 = arith.constant 0 : i32
    return %arg0, %c0_i32, %c0_i32_0 : i32, i32, i32
  }
}

</mosaic_0001>

<llo_original>
// kernel: tpu_custom_call.1
$region0: #{tpu_custom_call.1}
  #allocation0 [shape = 'u32[]', space=smem, size = 0x4, offset = 0x4, fixed_abs, tag = 'smem constant byte address 0x4 - core index']
  #allocation1 [shape = 'u32[144,128]{1,0:T(1,128)}', space=vmem, size = 0x12000, scoped, tag = 'internal scratch']
  #allocation2 [shape = 'f32[1,1]{1,0:T(1,128)S(1)}', space=vmem, size = 0x200, scoped, tag = 'scoped memory for tpu_custom_call.1']
  %s0 = inlined_call_operand.hbm [shape: f32[8,6], index: 0, kind: input, shape index: {}]
  %s1 = inlined_call_operand.hbm [shape: f32[6,128], index: 1, kind: input, shape index: {}]
  %s2 = inlined_call_operand.hbm [shape: bf16[3,128,128], index: 2, kind: input, shape index: {}]
  %s3 = inlined_call_operand.vmem [shape: f32[4,128], index: 3, kind: input, shape index: {}]
  %s4 = inlined_call_operand.vmem [shape: f32[1,128], index: 4, kind: input, shape index: {}]
  %s5 = inlined_call_operand.<no memory space> [shape: f32[1,1], index: 5, kind: input, shape index: {}]
  %s6 = inlined_call_operand.hbm [shape: f32[1,1,8], index: 6, kind: output, shape index: {}]
  %s7 = sld [smem:[#allocation0]]
  $region46: #{tpu_custom_call.1} parent=0
    _
  %s9 = ssub.s32 1, %s7
  %s10 = scalar_select 0, %s9, %s7
  %v11 = vstv %s5
  %12 = vst [vmem:[#allocation2] sm:$0x1] %v11
  $region1: #{tpu_custom_call.1} parent=0
    #allocation3 [shape = 'u8[4096]{0}', space=vmem, size = 0x1000, scoped, tag = 'input window, operand 0, single buffered']
    #allocation4 [shape = 's32[1]{0}', space=sflag, size = 0x4, scoped, tag = 'scoped memory for tpu_custom_call.1']
    #allocation5 [shape = 's32[1]{0}', space=sflag, size = 0x4, scoped, tag = 'scoped memory for tpu_custom_call.1']
    #allocation6 [shape = 'u8[4096]{0}', space=vmem, size = 0x1000, scoped, tag = 'input window, operand 1, single buffered']
    #allocation7 [shape = 's32[1]{0}', space=sflag, size = 0x4, scoped, tag = 'scoped memory for tpu_custom_call.1']
    #allocation8 [shape = 'u8[98304]{0}', space=vmem, size = 0x18000, scoped, tag = 'input window, operand 2, single buffered']
    #allocation9 [shape = 'u8[512]{0}', space=vmem, size = 0x400, scoped, tag = 'output window, operand 0, single buffered']
    %13 = vsyncpa [#allocation4], 0
    %14 = vsyncpa [#allocation7], 0
    %15 = vsyncpa [#allocation5], 0
    // Predicated region
    $region2: #{tpu_custom_call.1} parent=1 // pred_check
      _
    $region3: #{tpu_custom_call.1} parent=1 // pred_check_branch
      %17 = sbr.rel (0) target = $region5
    $region4: #{tpu_custom_call.1} parent=1 // pred_region
      %s19 = ssub.s32 128, 128
      %20 = vsyncadd [#allocation4], %s19
      %s22 = sshll.u32 [#allocation3], 4
      %s23 = int_to_ptr.vmem [resolvable:$true] %s22
      %25 = dma.hbm_to_vmem [thread:$0]  %s0, 128, %s23, [#allocation4]
    $region5: #{tpu_custom_call.1} parent=1 // pred_fallthru
      _
    // Predicated region
    $region6: #{tpu_custom_call.1} parent=1 // pred_check
      _
    $region7: #{tpu_custom_call.1} parent=1 // pred_check_branch
      %27 = sbr.rel (0) target = $region9
    $region8: #{tpu_custom_call.1} parent=1 // pred_region
      %s29 = ssub.s32 128, 128
      %30 = vsyncadd [#allocation7], %s29
      %s32 = sshll.u32 [#allocation6], 4
      %s33 = int_to_ptr.vmem [resolvable:$true] %s32
      %35 = dma.hbm_to_vmem [thread:$0]  %s1, 128, %s33, [#allocation7]
    $region9: #{tpu_custom_call.1} parent=1 // pred_fallthru
      _
    // Predicated region
    $region10: #{tpu_custom_call.1} parent=1 // pred_check
      _
    $region11: #{tpu_custom_call.1} parent=1 // pred_check_branch
      %37 = sbr.rel (0) target = $region13
    $region12: #{tpu_custom_call.1} parent=1 // pred_region
      %s39 = ssub.s32 3072, 3072
      %40 = vsyncadd [#allocation7], %s39
      %s41 = sshll.u32 [#allocation8], 4
      %s42 = int_to_ptr.vmem [resolvable:$true] %s41
      %47 = dma.hbm_to_vmem [thread:$0]  %s2, 3072, %s42, [#allocation7], 64, 64, 4
    $region13: #{tpu_custom_call.1} parent=1 // pred_fallthru
      _
    // Predicated region
    $region14: #{tpu_custom_call.1} parent=1 // pred_check
      _
    $region15: #{tpu_custom_call.1} parent=1 // pred_check_branch
      %49 = sbr.rel (0) target = $region17
    $region16: #{tpu_custom_call.1} parent=1 // pred_region
      _
    $region17: #{tpu_custom_call.1} parent=1 // pred_fallthru
      _
    // Predicated region
    $region18: #{tpu_custom_call.1} parent=1 // pred_check
      _
    $region19: #{tpu_custom_call.1} parent=1 // pred_check_branch
      %51 = sbr.rel (0) target = $region21
    $region20: #{tpu_custom_call.1} parent=1 // pred_region
      _
    $region21: #{tpu_custom_call.1} parent=1 // pred_fallthru
      _
    // Predicated region
    $region22: #{tpu_custom_call.1} parent=1 // pred_check
      _
    $region23: #{tpu_custom_call.1} parent=1 // pred_check_branch
      %53 = sbr.rel (0) target = $region25
    $region24: #{tpu_custom_call.1} parent=1 // pred_region
      _
    $region25: #{tpu_custom_call.1} parent=1 // pred_fallthru
      _
    // Predicated region
    $region26: #{tpu_custom_call.1} parent=1 // pred_check
      _
    $region27: #{tpu_custom_call.1} parent=1 // pred_check_branch
      %55 = sbr.rel (0) target = $region29
    $region28: #{tpu_custom_call.1} parent=1 // pred_region
      %56 = dma.done [#allocation4], 128
    $region29: #{tpu_custom_call.1} parent=1 // pred_fallthru
      _
    // Predicated region
    $region30: #{tpu_custom_call.1} parent=1 // pred_check
      _
    $region31: #{tpu_custom_call.1} parent=1 // pred_check_branch
      %58 = sbr.rel (0) target = $region33
    $region32: #{tpu_custom_call.1} parent=1 // pred_region
      %59 = dma.done [#allocation7], 128
    $region33: #{tpu_custom_call.1} parent=1 // pred_fallthru
      _
    // Predicated region
    $region34: #{tpu_custom_call.1} parent=1 // pred_check
      _
    $region35: #{tpu_custom_call.1} parent=1 // pred_check_branch
      %61 = sbr.rel (0) target = $region37
    $region36: #{tpu_custom_call.1} parent=1 // pred_region
      %62 = dma.done [#allocation7], 3072
    $region37: #{tpu_custom_call.1} parent=1 // pred_fallthru
      _
    %v64 = vld [vmem:[#allocation3] sm:$0xff]
    %v65 = vld [vmem:[#allocation6] sm:$0x3f]
    %v66 = vld [vmem:[%s3] sm:$0x1]
    %v67 = vlaneseq
    %v68 = vshrl.u32 %v67, 7
    %v69 = vsub.s32 0, %v68
    %v70 = vrot.slane %v66, %v69
    %vm71 = vcmask 48128
    %v73 = vsel %vm71, %v64, 0
    %vm75 = vcmask 1045504
    %v77 = vsel %vm75, %v65, 0
    %79 = vmatprep.subr.mxu0 0.0
    %80 = vmatpush1.msra.mxu0 %v77
    %81 = vmatprep.subr.mxu0 0.0
    %82 = vmatpush1.msra.mxu0 0.0
    %83 = vmatprep.subr.mxu0 0.0
    %84 = vmatpush1.msra.mxu0 0.0
    %85 = vmatprep.subr.mxu0 0.0
    %86 = vmatpush1.msra.mxu0 0.0
    %87 = vmatprep.subr.mxu0 0.0
    %88 = vmatpush1.msra.mxu0 0.0
    %89 = vmatprep.subr.mxu0 0.0
    %90 = vmatpush1.msra.mxu0 0.0
    %91 = vmatprep.subr.mxu0 0.0
    %92 = vmatpush1.msra.mxu0 0.0
    %93 = vmatprep.subr.mxu0 0.0
    %94 = vmatpush1.msra.mxu0 0.0
    %95 = vmatprep.subr.mxu0 0.0
    %96 = vmatpush1.msra.mxu0 0.0
    %97 = vmatprep.subr.mxu0 0.0
    %98 = vmatpush1.msra.mxu0 0.0
    %99 = vmatprep.subr.mxu0 0.0
    %100 = vmatpush1.msra.mxu0 0.0
    %101 = vmatprep.subr.mxu0 0.0
    %102 = vmatpush1.msra.mxu0 0.0
    %103 = vmatprep.subr.mxu0 0.0
    %104 = vmatpush1.msra.mxu0 0.0
    %105 = vmatprep.subr.mxu0 0.0
    %106 = vmatpush1.msra.mxu0 0.0
    %107 = vmatprep.subr.mxu0 0.0
    %108 = vmatpush1.msra.mxu0 0.0
    %109 = vmatprep.subr.mxu0 0.0
    %110 = vmatpush1.msra.mxu0 0.0
    %111 = vmatprep.subr.mxu0 0.0
    %112 = vmatpush1.msra.mxu0 0.0
    %113 = vmatprep.subr.mxu0 0.0
    %114 = vmatpush1.msra.mxu0 0.0
    %115 = vmatprep.subr.mxu0 0.0
    %116 = vmatpush1.msra.mxu0 0.0
    %117 = vmatprep.subr.mxu0 0.0
    %118 = vmatpush1.msra.mxu0 0.0
    %119 = vmatprep.subr.mxu0 0.0
    %120 = vmatpush1.msra.mxu0 0.0
    %121 = vmatprep.subr.mxu0 0.0
    %122 = vmatpush1.msra.mxu0 0.0
    %123 = vmatprep.subr.mxu0 0.0
    %124 = vmatpush1.msra.mxu0 0.0
    %125 = vmatprep.subr.mxu0 0.0
    %126 = vmatpush1.msra.mxu0 0.0
    %127 = vmatprep.subr.mxu0 0.0
    %128 = vmatpush1.msra.mxu0 0.0
    %129 = vmatprep.subr.mxu0 0.0
    %130 = vmatpush1.msra.mxu0 0.0
    %131 = vmatprep.subr.mxu0 0.0
    %132 = vmatpush1.msra.mxu0 0.0
    %133 = vmatprep.subr.mxu0 0.0
    %134 = vmatpush1.msra.mxu0 0.0
    %135 = vmatprep.subr.mxu0 0.0
    %136 = vmatpush1.msra.mxu0 0.0
    %137 = vmatprep.subr.mxu0 0.0
    %138 = vmatpush1.msra.mxu0 0.0
    %139 = vmatprep.subr.mxu0 0.0
    %140 = vmatpush1.msra.mxu0 0.0
    %141 = vmatprep.subr.mxu0 0.0
    %142 = vmatpush1.msra.mxu0 0.0
    %143 = vmatprep.mubr.f32.mxu0 0.0
    %144 = vmatmul.mubr.f32.gmra.mrb[0].mxu0 %v73
    %v145 = vpop.f32.mrb[0].mxu0
    %v146 = vadd.f32 %v70, %v145
    %v147 = vpop.f32.mrb[0].mxu0
    %148 = vdwg.mxu0
    %v149 = vmul.f32 %v146, 0.5
    %v150 = vmul.f32 %v146, %v146
    %v151 = vmul.f32 %v150, %v146
    %v152 = vmul.f32 %v151, 0.044715
    %v153 = vadd.f32 %v146, %v152
    %v154 = vmul.f32 %v153, 0.7978846
    %v155 = vtanh.pop %v154
    %v156 = vadd.f32 %v155, 1.0
    %v157 = vmul.f32 %v149, %v156
    %v158 = vpack.c.bf16 %v157, %v157
    %v159 = vld [vmem:[#allocation8] sm:$0xf]
    %v160 = vld [vmem:[#allocation8 + $0x4] sm:$0xf]
    %v161 = vld [vmem:[#allocation8 + $0x8] sm:$0xf]
    %v162 = vld [vmem:[#allocation8 + $0xc] sm:$0xf]
    %v163 = vld [vmem:[#allocation8 + $0x10] sm:$0xf]
    %v164 = vld [vmem:[#allocation8 + $0x14] sm:$0xf]
    %v165 = vld [vmem:[#allocation8 + $0x18] sm:$0xf]
    %v166 = vld [vmem:[#allocation8 + $0x1c] sm:$0xf]
    %v167 = vld [vmem:[#allocation8 + $0x20] sm:$0xf]
    %v168 = vld [vmem:[#allocation8 + $0x24] sm:$0xf]
    %v169 = vld [vmem:[#allocation8 + $0x28] sm:$0xf]
    %v170 = vld [vmem:[#allocation8 + $0x2c] sm:$0xf]
    %v171 = vld [vmem:[#allocation8 + $0x30] sm:$0xf]
    %v172 = vld [vmem:[#allocation8 + $0x34] sm:$0xf]
    %v173 = vld [vmem:[#allocation8 + $0x38] sm:$0xf]
    %v174 = vld [vmem:[#allocation8 + $0x3c] sm:$0xf]
    %v175 = vld [vmem:[%s3 + $0x1] sm:$0x1]
    %v176 = vlaneseq
    %v177 = vshrl.u32 %v176, 7
    %v178 = vsub.s32 0, %v177
    %v179 = vrot.slane %v175, %v178
    %v196 = vunpack.c.l.b16 %v159
    %v197 = vunpack.c.l.b16 %v160
    %v198 = vunpack.c.l.b16 %v161
    %v199 = vunpack.c.l.b16 %v162
    %v200 = vunpack.c.l.b16 %v163
    %v201 = vunpack.c.l.b16 %v164
    %v202 = vunpack.c.l.b16 %v165
    %v203 = vunpack.c.l.b16 %v166
    %v204 = vunpack.c.l.b16 %v167
    %v205 = vunpack.c.l.b16 %v168
    %v206 = vunpack.c.l.b16 %v169
    %v207 = vunpack.c.l.b16 %v170
    %v208 = vunpack.c.l.b16 %v171
    %v209 = vunpack.c.l.b16 %v172
    %v210 = vunpack.c.l.b16 %v173
    %v211 = vunpack.c.l.b16 %v174
    %v212 = vpack.c.b16 %v197, %v196
    %v213 = vpack.c.b16 %v199, %v198
    %v214 = vpack.c.b16 %v201, %v200
    %v215 = vpack.c.b16 %v203, %v202
    %v216 = vpack.c.b16 %v205, %v204
    %v217 = vpack.c.b16 %v207, %v206
    %v218 = vpack.c.b16 %v209, %v208
    %v219 = vpack.c.b16 %v211, %v210
    %228 = vmatprep.subr.bf16.mxu0 0
    %229 = vmatpush1.bf16.msra.mxu0 %v212
    %230 = vmatprep.subr.bf16.mxu0 0
    %231 = vmatpush1.bf16.msra.mxu0 %v213
    %232 = vmatprep.subr.bf16.mxu0 0
    %233 = vmatpush1.bf16.msra.mxu0 %v214
    %234 = vmatprep.subr.bf16.mxu0 0
    %235 = vmatpush1.bf16.msra.mxu0 %v215
    %236 = vmatprep.subr.bf16.mxu0 0
    %237 = vmatpush1.bf16.msra.mxu0 %v216
    %238 = vmatprep.subr.bf16.mxu0 0
    %239 = vmatpush1.bf16.msra.mxu0 %v217
    %240 = vmatprep.subr.bf16.mxu0 0
    %241 = vmatpush1.bf16.msra.mxu0 %v218
    %242 = vmatprep.subr.bf16.mxu0 0
    %243 = vmatpush1.bf16.msra.mxu0 %v219
    %244 = vmatprep.subr.bf16.mxu0 0
    %245 = vmatpush1.bf16.msra.mxu0 0
    %246 = vmatprep.subr.bf16.mxu0 0
    %247 = vmatpush1.bf16.msra.mxu0 0
    %248 = vmatprep.subr.bf16.mxu0 0
    %249 = vmatpush1.bf16.msra.mxu0 0
    %250 = vmatprep.subr.bf16.mxu0 0
    %251 = vmatpush1.bf16.msra.mxu0 0
    %252 = vmatprep.subr.bf16.mxu0 0
    %253 = vmatpush1.bf16.msra.mxu0 0
    %254 = vmatprep.subr.bf16.mxu0 0
    %255 = vmatpush1.bf16.msra.mxu0 0
    %256 = vmatprep.subr.bf16.mxu0 0
    %257 = vmatpush1.bf16.msra.mxu0 0
    %258 = vmatprep.subr.bf16.mxu0 0
    %259 = vmatpush1.bf16.msra.mxu0 0
    %260 = vmatprep.mubr.bf16.mxu0 0
    %261 = vmatmul.mubr.bf16.gmra.mrb[0].mxu0 %v158
    %v262 = vpop.f32.mrb[0].mxu0
    %v263 = vadd.f32 %v179, %v262
    %v264 = vpop.f32.mrb[0].mxu0
    %v265 = vpop.f32.mrb[0].mxu0
    %v266 = vpop.f32.mrb[0].mxu0
    %267 = vdwg.mxu0
    %v268 = vmul.f32 %v263, 0.5
    %v269 = vmul.f32 %v263, %v263
    %v270 = vmul.f32 %v269, %v263
    %v271 = vmul.f32 %v270, 0.044715
    %v272 = vadd.f32 %v263, %v271
    %v273 = vmul.f32 %v272, 0.7978846
    %v274 = vtanh.pop %v273
    %v275 = vadd.f32 %v274, 1.0
    %v276 = vmul.f32 %v268, %v275
    %v277 = vpack.c.bf16 %v276, %v276
    %s278 = scalar_lea.vmem [#allocation8], 64
    %v279 = vld [vmem:[%s278] sm:$0xf]
    %v280 = vld [vmem:[%s278 + $0x4] sm:$0xf]
    %v281 = vld [vmem:[%s278 + $0x8] sm:$0xf]
    %v282 = vld [vmem:[%s278 + $0xc] sm:$0xf]
    %v283 = vld [vmem:[%s278 + $0x10] sm:$0xf]
    %v284 = vld [vmem:[%s278 + $0x14] sm:$0xf]
    %v285 = vld [vmem:[%s278 + $0x18] sm:$0xf]
    %v286 = vld [vmem:[%s278 + $0x1c] sm:$0xf]
    %v287 = vld [vmem:[%s278 + $0x20] sm:$0xf]
    %v288 = vld [vmem:[%s278 + $0x24] sm:$0xf]
    %v289 = vld [vmem:[%s278 + $0x28] sm:$0xf]
    %v290 = vld [vmem:[%s278 + $0x2c] sm:$0xf]
    %v291 = vld [vmem:[%s278 + $0x30] sm:$0xf]
    %v292 = vld [vmem:[%s278 + $0x34] sm:$0xf]
    %v293 = vld [vmem:[%s278 + $0x38] sm:$0xf]
    %v294 = vld [vmem:[%s278 + $0x3c] sm:$0xf]
    %v295 = vld [vmem:[%s3 + $0x2] sm:$0x1]
    %v296 = vlaneseq
    %v297 = vshrl.u32 %v296, 7
    %v298 = vsub.s32 0, %v297
    %v299 = vrot.slane %v295, %v298
    %v316 = vunpack.c.l.b16 %v279
    %v317 = vunpack.c.l.b16 %v280
    %v318 = vunpack.c.l.b16 %v281
    %v319 = vunpack.c.l.b16 %v282
    %v320 = vunpack.c.l.b16 %v283
    %v321 = vunpack.c.l.b16 %v284
    %v322 = vunpack.c.l.b16 %v285
    %v323 = vunpack.c.l.b16 %v286
    %v324 = vunpack.c.l.b16 %v287
    %v325 = vunpack.c.l.b16 %v288
    %v326 = vunpack.c.l.b16 %v289
    %v327 = vunpack.c.l.b16 %v290
    %v328 = vunpack.c.l.b16 %v291
    %v329 = vunpack.c.l.b16 %v292
    %v330 = vunpack.c.l.b16 %v293
    %v331 = vunpack.c.l.b16 %v294
    %v332 = vpack.c.b16 %v317, %v316
    %v333 = vpack.c.b16 %v319, %v318
    %v334 = vpack.c.b16 %v321, %v320
    %v335 = vpack.c.b16 %v323, %v322
    %v336 = vpack.c.b16 %v325, %v324
    %v337 = vpack.c.b16 %v327, %v326
    %v338 = vpack.c.b16 %v329, %v328
    %v339 = vpack.c.b16 %v331, %v330
    %348 = vmatprep.subr.bf16.mxu0 0
    %349 = vmatpush1.bf16.msra.mxu0 %v332
    %350 = vmatprep.subr.bf16.mxu0 0
    %351 = vmatpush1.bf16.msra.mxu0 %v333
    %352 = vmatprep.subr.bf16.mxu0 0
    %353 = vmatpush1.bf16.msra.mxu0 %v334
    %354 = vmatprep.subr.bf16.mxu0 0
    %355 = vmatpush1.bf16.msra.mxu0 %v335
    %356 = vmatprep.subr.bf16.mxu0 0
    %357 = vmatpush1.bf16.msra.mxu0 %v336
    %358 = vmatprep.subr.bf16.mxu0 0
    %359 = vmatpush1.bf16.msra.mxu0 %v337
    %360 = vmatprep.subr.bf16.mxu0 0
    %361 = vmatpush1.bf16.msra.mxu0 %v338
    %362 = vmatprep.subr.bf16.mxu0 0
    %363 = vmatpush1.bf16.msra.mxu0 %v339
    %364 = vmatprep.subr.bf16.mxu0 0
    %365 = vmatpush1.bf16.msra.mxu0 0
    %366 = vmatprep.subr.bf16.mxu0 0
    %367 = vmatpush1.bf16.msra.mxu0 0
    %368 = vmatprep.subr.bf16.mxu0 0
    %369 = vmatpush1.bf16.msra.mxu0 0
    %370 = vmatprep.subr.bf16.mxu0 0
    %371 = vmatpush1.bf16.msra.mxu0 0
    %372 = vmatprep.subr.bf16.mxu0 0
    %373 = vmatpush1.bf16.msra.mxu0 0
    %374 = vmatprep.subr.bf16.mxu0 0
    %375 = vmatpush1.bf16.msra.mxu0 0
    %376 = vmatprep.subr.bf16.mxu0 0
    %377 = vmatpush1.bf16.msra.mxu0 0
    %378 = vmatprep.subr.bf16.mxu0 0
    %379 = vmatpush1.bf16.msra.mxu0 0
    %380 = vmatprep.mubr.bf16.mxu0 0
    %381 = vmatmul.mubr.bf16.gmra.mrb[0].mxu0 %v277
    %v382 = vpop.f32.mrb[0].mxu0
    %v383 = vadd.f32 %v299, %v382
    %v384 = vpop.f32.mrb[0].mxu0
    %v385 = vpop.f32.mrb[0].mxu0
    %v386 = vpop.f32.mrb[0].mxu0
    %387 = vdwg.mxu0
    %v388 = vmul.f32 %v383, 0.5
    %v389 = vmul.f32 %v383, %v383
    %v390 = vmul.f32 %v389, %v383
    %v391 = vmul.f32 %v390, 0.044715
    %v392 = vadd.f32 %v383, %v391
    %v393 = vmul.f32 %v392, 0.7978846
    %v394 = vtanh.pop %v393
    %v395 = vadd.f32 %v394, 1.0
    %v396 = vmul.f32 %v388, %v395
    %v397 = vpack.c.bf16 %v396, %v396
    %s398 = scalar_lea.vmem [#allocation8], 128
    %v399 = vld [vmem:[%s398] sm:$0xf]
    %v400 = vld [vmem:[%s398 + $0x4] sm:$0xf]
    %v401 = vld [vmem:[%s398 + $0x8] sm:$0xf]
    %v402 = vld [vmem:[%s398 + $0xc] sm:$0xf]
    %v403 = vld [vmem:[%s398 + $0x10] sm:$0xf]
    %v404 = vld [vmem:[%s398 + $0x14] sm:$0xf]
    %v405 = vld [vmem:[%s398 + $0x18] sm:$0xf]
    %v406 = vld [vmem:[%s398 + $0x1c] sm:$0xf]
    %v407 = vld [vmem:[%s398 + $0x20] sm:$0xf]
    %v408 = vld [vmem:[%s398 + $0x24] sm:$0xf]
    %v409 = vld [vmem:[%s398 + $0x28] sm:$0xf]
    %v410 = vld [vmem:[%s398 + $0x2c] sm:$0xf]
    %v411 = vld [vmem:[%s398 + $0x30] sm:$0xf]
    %v412 = vld [vmem:[%s398 + $0x34] sm:$0xf]
    %v413 = vld [vmem:[%s398 + $0x38] sm:$0xf]
    %v414 = vld [vmem:[%s398 + $0x3c] sm:$0xf]
    %v415 = vld [vmem:[%s3 + $0x3] sm:$0x1]
    %v416 = vlaneseq
    %v417 = vshrl.u32 %v416, 7
    %v418 = vsub.s32 0, %v417
    %v419 = vrot.slane %v415, %v418
    %v436 = vunpack.c.l.b16 %v399
    %v437 = vunpack.c.l.b16 %v400
    %v438 = vunpack.c.l.b16 %v401
    %v439 = vunpack.c.l.b16 %v402
    %v440 = vunpack.c.l.b16 %v403
    %v441 = vunpack.c.l.b16 %v404
    %v442 = vunpack.c.l.b16 %v405
    %v443 = vunpack.c.l.b16 %v406
    %v444 = vunpack.c.l.b16 %v407
    %v445 = vunpack.c.l.b16 %v408
    %v446 = vunpack.c.l.b16 %v409
    %v447 = vunpack.c.l.b16 %v410
    %v448 = vunpack.c.l.b16 %v411
    %v449 = vunpack.c.l.b16 %v412
    %v450 = vunpack.c.l.b16 %v413
    %v451 = vunpack.c.l.b16 %v414
    %v452 = vpack.c.b16 %v437, %v436
    %v453 = vpack.c.b16 %v439, %v438
    %v454 = vpack.c.b16 %v441, %v440
    %v455 = vpack.c.b16 %v443, %v442
    %v456 = vpack.c.b16 %v445, %v444
    %v457 = vpack.c.b16 %v447, %v446
    %v458 = vpack.c.b16 %v449, %v448
    %v459 = vpack.c.b16 %v451, %v450
    %468 = vmatprep.subr.bf16.mxu0 0
    %469 = vmatpush1.bf16.msra.mxu0 %v452
    %470 = vmatprep.subr.bf16.mxu0 0
    %471 = vmatpush1.bf16.msra.mxu0 %v453
    %472 = vmatprep.subr.bf16.mxu0 0
    %473 = vmatpush1.bf16.msra.mxu0 %v454
    %474 = vmatprep.subr.bf16.mxu0 0
    %475 = vmatpush1.bf16.msra.mxu0 %v455
    %476 = vmatprep.subr.bf16.mxu0 0
    %477 = vmatpush1.bf16.msra.mxu0 %v456
    %478 = vmatprep.subr.bf16.mxu0 0
    %479 = vmatpush1.bf16.msra.mxu0 %v457
    %480 = vmatprep.subr.bf16.mxu0 0
    %481 = vmatpush1.bf16.msra.mxu0 %v458
    %482 = vmatprep.subr.bf16.mxu0 0
    %483 = vmatpush1.bf16.msra.mxu0 %v459
    %484 = vmatprep.subr.bf16.mxu0 0
    %485 = vmatpush1.bf16.msra.mxu0 0
    %486 = vmatprep.subr.bf16.mxu0 0
    %487 = vmatpush1.bf16.msra.mxu0 0
    %488 = vmatprep.subr.bf16.mxu0 0
    %489 = vmatpush1.bf16.msra.mxu0 0
    %490 = vmatprep.subr.bf16.mxu0 0
    %491 = vmatpush1.bf16.msra.mxu0 0
    %492 = vmatprep.subr.bf16.mxu0 0
    %493 = vmatpush1.bf16.msra.mxu0 0
    %494 = vmatprep.subr.bf16.mxu0 0
    %495 = vmatpush1.bf16.msra.mxu0 0
    %496 = vmatprep.subr.bf16.mxu0 0
    %497 = vmatpush1.bf16.msra.mxu0 0
    %498 = vmatprep.subr.bf16.mxu0 0
    %499 = vmatpush1.bf16.msra.mxu0 0
    %500 = vmatprep.mubr.bf16.mxu0 0
    %501 = vmatmul.mubr.bf16.gmra.mrb[0].mxu0 %v397
    %v502 = vpop.f32.mrb[0].mxu0
    %v503 = vadd.f32 %v419, %v502
    %v504 = vpop.f32.mrb[0].mxu0
    %v505 = vpop.f32.mrb[0].mxu0
    %v506 = vpop.f32.mrb[0].mxu0
    %507 = vdwg.mxu0
    %v508 = vmul.f32 %v503, 0.5
    %v509 = vmul.f32 %v503, %v503
    %v510 = vmul.f32 %v509, %v503
    %v511 = vmul.f32 %v510, 0.044715
    %v512 = vadd.f32 %v503, %v511
    %v513 = vmul.f32 %v512, 0.7978846
    %v514 = vtanh.pop %v513
    %v515 = vadd.f32 %v514, 1.0
    %v516 = vmul.f32 %v508, %v515
    %v517 = vld [vmem:[%s4] sm:$0x1]
    %v518 = vld [vmem:[#allocation2] sm:$0x1]
    %520 = vset.pattern.permute.xlu0 0
    %521 = vperm.xlu0 %520, %v518
    %v522 = vpop.permute.xlu0 %521
    %v524 = vlaneseq
    %v525 = vshrl.u32 %v524, 7
    %v526 = vsub.s32 0, %v525
    %v527 = vrot.slane %v522, %v526
    %528 = vmatprep.subr.mxu0 0.0
    %529 = vmatpush1.xpose.msra.mxu0 %v516
    %530 = vmatprep.subr.mxu0 0.0
    %531 = vmatpush1.xpose.msra.mxu0 0.0
    %532 = vmatprep.subr.mxu0 0.0
    %533 = vmatpush1.xpose.msra.mxu0 0.0
    %534 = vmatprep.subr.mxu0 0.0
    %535 = vmatpush1.xpose.msra.mxu0 0.0
    %536 = vmatprep.subr.mxu0 0.0
    %537 = vmatpush1.xpose.msra.mxu0 0.0
    %538 = vmatprep.subr.mxu0 0.0
    %539 = vmatpush1.xpose.msra.mxu0 0.0
    %540 = vmatprep.subr.mxu0 0.0
    %541 = vmatpush1.xpose.msra.mxu0 0.0
    %542 = vmatprep.subr.mxu0 0.0
    %543 = vmatpush1.xpose.msra.mxu0 0.0
    %544 = vmatprep.subr.mxu0 0.0
    %545 = vmatpush1.xpose.msra.mxu0 0.0
    %546 = vmatprep.subr.mxu0 0.0
    %547 = vmatpush1.xpose.msra.mxu0 0.0
    %548 = vmatprep.subr.mxu0 0.0
    %549 = vmatpush1.xpose.msra.mxu0 0.0
    %550 = vmatprep.subr.mxu0 0.0
    %551 = vmatpush1.xpose.msra.mxu0 0.0
    %552 = vmatprep.subr.mxu0 0.0
    %553 = vmatpush1.xpose.msra.mxu0 0.0
    %554 = vmatprep.subr.mxu0 0.0
    %555 = vmatpush1.xpose.msra.mxu0 0.0
    %556 = vmatprep.subr.mxu0 0.0
    %557 = vmatpush1.xpose.msra.mxu0 0.0
    %558 = vmatprep.subr.mxu0 0.0
    %559 = vmatpush1.xpose.msra.mxu0 0.0
    %560 = vmatprep.subr.mxu0 0.0
    %561 = vmatpush1.xpose.msra.mxu0 0.0
    %562 = vmatprep.subr.mxu0 0.0
    %563 = vmatpush1.xpose.msra.mxu0 0.0
    %564 = vmatprep.subr.mxu0 0.0
    %565 = vmatpush1.xpose.msra.mxu0 0.0
    %566 = vmatprep.subr.mxu0 0.0
    %567 = vmatpush1.xpose.msra.mxu0 0.0
    %568 = vmatprep.subr.mxu0 0.0
    %569 = vmatpush1.xpose.msra.mxu0 0.0
    %570 = vmatprep.subr.mxu0 0.0
    %571 = vmatpush1.xpose.msra.mxu0 0.0
    %572 = vmatprep.subr.mxu0 0.0
    %573 = vmatpush1.xpose.msra.mxu0 0.0
    %574 = vmatprep.subr.mxu0 0.0
    %575 = vmatpush1.xpose.msra.mxu0 0.0
    %576 = vmatprep.subr.mxu0 0.0
    %577 = vmatpush1.xpose.msra.mxu0 0.0
    %578 = vmatprep.subr.mxu0 0.0
    %579 = vmatpush1.xpose.msra.mxu0 0.0
    %580 = vmatprep.subr.mxu0 0.0
    %581 = vmatpush1.xpose.msra.mxu0 0.0
    %582 = vmatprep.subr.mxu0 0.0
    %583 = vmatpush1.xpose.msra.mxu0 0.0
    %584 = vmatprep.subr.mxu0 0.0
    %585 = vmatpush1.xpose.msra.mxu0 0.0
    %586 = vmatprep.subr.mxu0 0.0
    %587 = vmatpush1.xpose.msra.mxu0 0.0
    %588 = vmatprep.subr.mxu0 0.0
    %589 = vmatpush1.xpose.msra.mxu0 0.0
    %590 = vmatprep.subr.mxu0 0.0
    %591 = vmatpush1.xpose.msra.mxu0 0.0
    %592 = vmatprep.mubr.f32.mxu0 0.0
    %593 = vmatmul.mubr.f32.gmra.mrb[0].mxu0 %v517
    %v594 = vpop.f32.mrb[0].mxu0
    %v595 = vadd.f32 %v527, %v594
    %v596 = vpop.f32.mrb[0].mxu0
    %597 = vdwg.mxu0
    %vm598 = vcmask 57344
    %599 = vst.msk [vmem:[#allocation9] sm:$0x1] %vm598, %v595
    // Predicated region
    $region38: #{tpu_custom_call.1} parent=1 // pred_check
      _
    $region39: #{tpu_custom_call.1} parent=1 // pred_check_branch
      %601 = sbr.rel (0) target = $region41
    $region40: #{tpu_custom_call.1} parent=1 // pred_region
      %s603 = ssub.s32 16, 16
      %604 = vsyncadd [#allocation5], %s603
      %s606 = sshll.u32 [#allocation9], 4
      %s607 = int_to_ptr.vmem [resolvable:$true] %s606
      %609 = dma.vmem_to_hbm [thread:$0]  %s607, 16, %s6, [#allocation5]
    $region41: #{tpu_custom_call.1} parent=1 // pred_fallthru
      _
    // Predicated region
    $region42: #{tpu_custom_call.1} parent=1 // pred_check
      _
    $region43: #{tpu_custom_call.1} parent=1 // pred_check_branch
      %611 = sbr.rel (0) target = $region45
    $region44: #{tpu_custom_call.1} parent=1 // pred_region
      %612 = dma.done [#allocation5], 16
    $region45: #{tpu_custom_call.1} parent=1 // pred_fallthru
      _
    %613 = vsyncpa [#allocation4], 1
    %614 = vsyncpa [#allocation7], 1
    %615 = vsyncpa [#allocation5], 1

</llo_original>
